<compile_context>
chip_gen: v5e
topology: v5e:2x2
jax: 0.10.0
libtpu: 0.0.40
codegen_flags: <defaults>
</compile_context>

<pallas_src>
from functools import partial

import jax
import jax.numpy as jnp
from jax.experimental import pallas as pl
from jax.experimental.pallas import tpu as pltpu


def _round_up(a, b):
    return ((a + b - 1) // b) * b


# ----------------------------------------------------------------------------
# Kernel
# ----------------------------------------------------------------------------
def mabsa_head_kernel(x_ref, w1_ref, b1_ref, w2_ref, b2_ref, o_ref, h_acc):
    # x_ref:  (tm, tk)  f32 tile of tokens (cast to bf16 in-kernel)
    # w1_ref: (tk, Hp)  bf16, b1_ref: (1, Hp) f32
    # w2_ref: (Hp, Lp)  bf16, b2_ref: (1, Lp) f32
    # o_ref:  (tm, Lp)  bf16 (lane-dense, Lp multiple of 128)
    # h_acc:  (tm, Hp)  f32 VMEM accumulator (K-tiling over D)
    k = pl.program_id(1)

    @pl.when(k == 0)
    def _():
        h_acc[...] = jnp.zeros_like(h_acc)

    x = x_ref[...].astype(jnp.bfloat16)            # in-kernel bf16 cast
    h_acc[...] += jnp.dot(x, w1_ref[...], preferred_element_type=jnp.float32)

    @pl.when(k == pl.num_programs(1) - 1)
    def _():
        h = jnp.maximum(h_acc[...] + b1_ref[...], 0.0)      # bias + ReLU (f32)
        h = h.astype(jnp.bfloat16)                           # back to bf16 for MXU
        logits = jnp.dot(h, w2_ref[...], preferred_element_type=jnp.float32)
        logits = logits + b2_ref[...]
        o_ref[...] = logits.astype(o_ref.dtype)


# ----------------------------------------------------------------------------
# Parameter prep (run ONCE at load time, not per forward call)
# ----------------------------------------------------------------------------
def prepare_mabsa_params(w1, b1, w2, b2):
    """w1:(D,H) b1:(H,) w2:(H,L) b2:(L,)  ->  padded / bf16 kernel-layout params."""
    D, H = w1.shape
    L = w2.shape[1]
    H_pad = _round_up(max(H, 128), 128)
    L_pad = _round_up(max(L, 128), 128)

    w1_p = jnp.zeros((D, H_pad), jnp.bfloat16).at[:, :H].set(w1.astype(jnp.bfloat16))
    b1_p = jnp.zeros((1, H_pad), jnp.float32).at[:, :H].set(
        b1.reshape(1, H).astype(jnp.float32))
    w2_p = jnp.zeros((H_pad, L_pad), jnp.bfloat16).at[:H, :L].set(
        w2.astype(jnp.bfloat16))
    b2_p = jnp.zeros((1, L_pad), jnp.float32).at[:, :L].set(
        b2.reshape(1, L).astype(jnp.float32))
    return w1_p, b1_p, w2_p, b2_p, L


# ----------------------------------------------------------------------------
# Tile / VMEM sizing helpers
# ----------------------------------------------------------------------------
_TM_LADDER = (1024, 512, 256, 128, 64)
_VMEM_BUDGET = 40 << 20      # conservative: fits v7x's 64 MiB physical VMEM


def _vmem_estimate(tm, tk, H_pad, L_pad):
    x_bufs = 2 * tm * tk * 4              # f32 activation tiles, double-buffered
    w1_bufs = 2 * tk * H_pad * 2          # bf16 fc weight block
    w2_bufs = 2 * H_pad * L_pad * 2       # bf16 classifier weight (resident)
    bias_bufs = 2 * (H_pad + L_pad) * 4
    out_bufs = 2 * tm * L_pad * 2         # bf16 logits tiles
    h_scratch = tm * H_pad * 4            # f32 accumulator
    temps = tm * tk * 2 + tm * H_pad * 2  # bf16 copies of x and h
    return x_bufs + w1_bufs + w2_bufs + bias_bufs + out_bufs + h_scratch + temps


def _pick_tiles(M, D, H_pad, L_pad):
    # K-tiling of the fc weight only when it would be too big to keep resident.
    tk = D
    if D * H_pad * 2 > (16 << 20):
        for cand in (512, 256, 128):
            if D % cand == 0:
                tk = cand
                break

    fitting = [t for t in _TM_LADDER if _vmem_estimate(t, tk, H_pad, L_pad) <= _VMEM_BUDGET]
    if not fitting:
        fitting = [_TM_LADDER[-1]]

    tm = fitting[0]
    for t in fitting:                      # prefer >=4 steps (2 per v7x core)
        if pl.cdiv(M, t) >= 4:
            tm = t
            break
    else:
        for t in fitting:                  # else >=2 steps so DMA can pipeline
            if pl.cdiv(M, t) >= 2:
                tm = t
                break
    tm = max(8, min(tm, _round_up(M, 8)))  # don't over-allocate for tiny M
    return tm, tk


# ----------------------------------------------------------------------------
# Forward wrapper
# ----------------------------------------------------------------------------
@partial(jax.jit, static_argnames=("num_labels",))
def mabsa_head_forward(seq_features, w1_p, b1_p, w2_p, b2_p, *, num_labels):
    """seq_features: (B, S, D) f32 -> logits (B, S, num_labels) f32."""
    B, S, D = seq_features.shape
    H_pad = w1_p.shape[1]
    L_pad = w2_p.shape[1]
    M = B * S

    tm, tk = _pick_tiles(M, D, H_pad, L_pad)
    grid_m = pl.cdiv(M, tm)
    grid_k = pl.cdiv(D, tk)

    x2d = seq_features.reshape(M, D)       # free (row-major bitcast), stays f32

    est = _vmem_estimate(tm, tk, H_pad, L_pad)
    vmem_limit = int(min(max(est + (4 << 20), 20 << 20), 56 << 20))

    cost = pl.CostEstimate(
        flops=2 * M * (D * H_pad + H_pad * L_pad),
        transcendentals=0,
        bytes_accessed=(M * D * 4 + M * L_pad * 2
                        + D * H_pad * 2 + H_pad * 4
                        + H_pad * L_pad * 2 + L_pad * 4),
    )

    out2d = pl.pallas_call(
        mabsa_head_kernel,
        out_shape=jax.ShapeDtypeStruct((M, L_pad), jnp.bfloat16),
        grid_spec=pltpu.PrefetchScalarGridSpec(
            num_scalar_prefetch=0,
            grid=(grid_m, grid_k),
            in_specs=[
                pl.BlockSpec((tm, tk), lambda i, k: (i, k)),        # activations
                pl.BlockSpec((tk, H_pad), lambda i, k: (k, 0)),     # fc weight
                pl.BlockSpec((1, H_pad), lambda i, k: (0, 0)),      # fc bias
                pl.BlockSpec((H_pad, L_pad), lambda i, k: (0, 0)),  # classifier W
                pl.BlockSpec((1, L_pad), lambda i, k: (0, 0)),      # classifier b
            ],
            out_specs=pl.BlockSpec((tm, L_pad), lambda i, k: (i, 0)),
            scratch_shapes=[pltpu.VMEM((tm, H_pad), jnp.float32)],
        ),
        compiler_params=pltpu.CompilerParams(
            dimension_semantics=("parallel", "arbitrary"),
            vmem_limit_bytes=vmem_limit,
        ),
        cost_estimate=cost,
    )(x2d, w1_p, b1_p, w2_p, b2_p)

    # Slice off lane padding, upcast to f32 for PyTorch parity.
    return out2d[:, :num_labels].astype(jnp.float32).reshape(B, S, num_labels)


# ----------------------------------------------------------------------------
# Deterministic PyTorch-style init
# ----------------------------------------------------------------------------
def init_params(key, input_dim, hidden_dim, num_labels):
    k1, k2, k3, k4 = jax.random.split(key, 4)
    bound1 = 1.0 / (input_dim ** 0.5)
    bound2 = 1.0 / (hidden_dim ** 0.5)
    # Stored transposed relative to nn.Linear.weight: (in, out)
    w1 = jax.random.uniform(k1, (input_dim, hidden_dim), jnp.float32, -bound1, bound1)
    b1 = jax.random.uniform(k2, (hidden_dim,), jnp.float32, -bound1, bound1)
    w2 = jax.random.uniform(k3, (hidden_dim, num_labels), jnp.float32, -bound2, bound2)
    b2 = jax.random.uniform(k4, (num_labels,), jnp.float32, -bound2, bound2)
    return w1, b1, w2, b2


if __name__ == "__main__":
    # Small shapes consistent with the module: (batch, seq, input_dim)
    B, S, D = 2, 8, 32
    H = D            # hidden_dim defaults to input_dim
    L = 7            # num_labels

    key = jax.random.PRNGKey(0)
    kx, kp = jax.random.split(key)
    seq_features = jax.random.normal(kx, (B, S, D), jnp.float32)
    w1, b1, w2, b2 = init_params(kp, D, H, L)

    # One-time parameter prep (hoisted out of the forward path).
    w1_p, b1_p, w2_p, b2_p, num_labels = prepare_mabsa_params(w1, b1, w2, b2)

    logits = mabsa_head_forward(seq_features, w1_p, b1_p, w2_p, b2_p,
                                num_labels=num_labels)
    logits = jax.block_until_ready(logits)
    assert logits.shape == (B, S, L)

    # Reference using the same bf16-input / f32-accumulate / bf16-store
    # arithmetic as the kernel (tight tolerance), ...
    xb = seq_features.reshape(B * S, D).astype(jnp.bfloat16)
    h_ref = jnp.dot(xb, w1.astype(jnp.bfloat16),
                    preferred_element_type=jnp.float32) + b1
    h_ref = jnp.maximum(h_ref, 0.0).astype(jnp.bfloat16)
    ref_bf16 = (jnp.dot(h_ref, w2.astype(jnp.bfloat16),
                        preferred_element_type=jnp.float32) + b2)
    ref_bf16 = ref_bf16.astype(jnp.bfloat16).astype(jnp.float32).reshape(B, S, L)
    assert jnp.allclose(logits, ref_bf16, atol=1e-2, rtol=1e-2), (
        float(jnp.max(jnp.abs(logits - ref_bf16))))

    # ... plus a looser sanity check against the pure-f32 PyTorch math.
    ref_f32 = jnp.maximum(seq_features @ w1 + b1, 0.0) @ w2 + b2
    assert jnp.allclose(logits, ref_f32, atol=6e-2, rtol=6e-2), (
        float(jnp.max(jnp.abs(logits - ref_f32))))

    print("KERNEL_OK")
</pallas_src>

<mosaic_0001>
module attributes {stable_mosaic.version = 11 : i64} {
  func.func @mabsa_head_kernel(%arg0: i32, %arg1: i32, %arg2: memref<16x32xf32, #tpu.memory_space<vmem>>, %arg3: memref<32x128xbf16, #tpu.memory_space<vmem>>, %arg4: memref<1x128xf32, #tpu.memory_space<vmem>>, %arg5: memref<128x128xbf16, #tpu.memory_space<vmem>>, %arg6: memref<1x128xf32, #tpu.memory_space<vmem>>, %arg7: memref<16x128xbf16, #tpu.memory_space<vmem>>, %arg8: memref<16x128xf32, #tpu.memory_space<vmem>>) attributes {dimension_semantics = [#tpu.dimension_semantics<parallel>, #tpu.dimension_semantics<arbitrary>], iteration_bounds = array<i64: 1, 1>, scalar_prefetch = 0 : i64, scratch_operands = 1 : i64, tpu.core_type = #tpu.core_type<tc>, window_params = [{transform_indices = @transform_0, window_bounds = array<i64: 16, 32>}, {transform_indices = @transform_1, window_bounds = array<i64: 32, 128>}, {pipeline_mode = #tpu.pipeline_mode<synchronous>, transform_indices = @transform_2, window_bounds = array<i64: 1, 128>}, {pipeline_mode = #tpu.pipeline_mode<synchronous>, transform_indices = @transform_3, window_bounds = array<i64: 128, 128>}, {pipeline_mode = #tpu.pipeline_mode<synchronous>, transform_indices = @transform_4, window_bounds = array<i64: 1, 128>}, {transform_indices = @transform_5, window_bounds = array<i64: 16, 128>}]} {
    %c0_i32 = arith.constant 0 : i32
    %0 = arith.cmpi eq, %arg1, %c0_i32 : i32
    %1 = arith.extui %0 : i1 to i32
    %c0_i32_0 = arith.constant 0 : i32
    %2 = arith.cmpi ne, %1, %c0_i32_0 : i32
    scf.if %2 {
      %cst_10 = arith.constant 0.000000e+00 : f32
      %13 = vector.broadcast %cst_10 : f32 to vector<16x128xf32>
      %c0_11 = arith.constant 0 : index
      %c0_12 = arith.constant 0 : index
      %14 = vector.load %arg8[%c0_11, %c0_12] : memref<16x128xf32, #tpu.memory_space<vmem>>, vector<16x128xf32>
      tpu.vector_store %arg8[%c0_11, %c0_12], %13 {strides = array<i32>} : memref<16x128xf32, #tpu.memory_space<vmem>>, vector<16x128xf32>,
    } else {
    }
    %c0 = arith.constant 0 : index
    %c0_1 = arith.constant 0 : index
    %3 = vector.load %arg2[%c0, %c0_1] : memref<16x32xf32, #tpu.memory_space<vmem>>, vector<16x32xf32>
    %4 = arith.truncf %3 : vector<16x32xf32> to vector<16x32xbf16>
    %c0_2 = arith.constant 0 : index
    %c0_3 = arith.constant 0 : index
    %5 = vector.load %arg8[%c0_2, %c0_3] : memref<16x128xf32, #tpu.memory_space<vmem>>, vector<16x128xf32>
    %c0_4 = arith.constant 0 : index
    %c0_5 = arith.constant 0 : index
    %6 = vector.load %arg3[%c0_4, %c0_5] : memref<32x128xbf16, #tpu.memory_space<vmem>>, vector<32x128xbf16>
    %cst = arith.constant dense<0.000000e+00> : vector<16x128xf32>
    %7 = tpu.matmul %4, %6, %cst {dimension_numbers = #tpu.dot_dimension_numbers<[1], [0], [0], [1], [0, 0, 1, 1], [], []>} : vector<16x32xbf16>, vector<32x128xbf16>, vector<16x128xf32> -> vector<16x128xf32>
    %8 = arith.addf %5, %7 : vector<16x128xf32>
    %c0_6 = arith.constant 0 : index
    %c0_7 = arith.constant 0 : index
    %9 = vector.load %arg8[%c0_6, %c0_7] : memref<16x128xf32, #tpu.memory_space<vmem>>, vector<16x128xf32>
    tpu.vector_store %arg8[%c0_6, %c0_7], %8 {strides = array<i32>} : memref<16x128xf32, #tpu.memory_space<vmem>>, vector<16x128xf32>,
    %c0_i32_8 = arith.constant 0 : i32
    %10 = arith.cmpi eq, %arg1, %c0_i32_8 : i32
    %11 = arith.extui %10 : i1 to i32
    %c0_i32_9 = arith.constant 0 : i32
    %12 = arith.cmpi ne, %11, %c0_i32_9 : i32
    scf.if %12 {
      %c0_10 = arith.constant 0 : index
      %c0_11 = arith.constant 0 : index
      %13 = vector.load %arg8[%c0_10, %c0_11] : memref<16x128xf32, #tpu.memory_space<vmem>>, vector<16x128xf32>
      %c0_12 = arith.constant 0 : index
      %c0_13 = arith.constant 0 : index
      %14 = vector.load %arg4[%c0_12, %c0_13] : memref<1x128xf32, #tpu.memory_space<vmem>>, vector<1x128xf32>
      %15 = vector.broadcast %14 : vector<1x128xf32> to vector<16x128xf32>
      %16 = arith.addf %13, %15 : vector<16x128xf32>
      %cst_14 = arith.constant 0.000000e+00 : f32
      %17 = vector.broadcast %cst_14 : f32 to vector<16x128xf32>
      %18 = arith.maximumf %16, %17 : vector<16x128xf32>
      %19 = arith.truncf %18 : vector<16x128xf32> to vector<16x128xbf16>
      %c0_15 = arith.constant 0 : index
      %c0_16 = arith.constant 0 : index
      %20 = vector.load %arg5[%c0_15, %c0_16] : memref<128x128xbf16, #tpu.memory_space<vmem>>, vector<128x128xbf16>
      %cst_17 = arith.constant dense<0.000000e+00> : vector<16x128xf32>
      %21 = tpu.matmul %19, %20, %cst_17 {dimension_numbers = #tpu.dot_dimension_numbers<[1], [0], [0], [1], [0, 0, 1, 1], [], []>} : vector<16x128xbf16>, vector<128x128xbf16>, vector<16x128xf32> -> vector<16x128xf32>
      %c0_18 = arith.constant 0 : index
      %c0_19 = arith.constant 0 : index
      %22 = vector.load %arg6[%c0_18, %c0_19] : memref<1x128xf32, #tpu.memory_space<vmem>>, vector<1x128xf32>
      %23 = vector.broadcast %22 : vector<1x128xf32> to vector<16x128xf32>
      %24 = arith.addf %21, %23 : vector<16x128xf32>
      %25 = arith.truncf %24 : vector<16x128xf32> to vector<16x128xbf16>
      %c0_20 = arith.constant 0 : index
      %c0_21 = arith.constant 0 : index
      %26 = vector.load %arg7[%c0_20, %c0_21] : memref<16x128xbf16, #tpu.memory_space<vmem>>, vector<16x128xbf16>
      tpu.vector_store %arg7[%c0_20, %c0_21], %25 {strides = array<i32>} : memref<16x128xbf16, #tpu.memory_space<vmem>>, vector<16x128xbf16>,
    } else {
    }
    return
  }
  func.func @transform_0(%arg0: i32, %arg1: i32) -> (i32, i32) {
    %c0_i32 = arith.constant 0 : i32
    return %arg0, %arg1 : i32, i32
  }
  func.func @transform_1(%arg0: i32, %arg1: i32) -> (i32, i32) {
    %c0_i32 = arith.constant 0 : i32
    %c0_i32_0 = arith.constant 0 : i32
    return %arg1, %c0_i32 : i32, i32
  }
  func.func @transform_2(%arg0: i32, %arg1: i32) -> (i32, i32) {
    %c0_i32 = arith.constant 0 : i32
    %c0_i32_0 = arith.constant 0 : i32
    %c0_i32_1 = arith.constant 0 : i32
    return %c0_i32, %c0_i32_0 : i32, i32
  }
  func.func @transform_3(%arg0: i32, %arg1: i32) -> (i32, i32) {
    %c0_i32 = arith.constant 0 : i32
    %c0_i32_0 = arith.constant 0 : i32
    %c0_i32_1 = arith.constant 0 : i32
    return %c0_i32, %c0_i32_0 : i32, i32
  }
  func.func @transform_4(%arg0: i32, %arg1: i32) -> (i32, i32) {
    %c0_i32 = arith.constant 0 : i32
    %c0_i32_0 = arith.constant 0 : i32
    %c0_i32_1 = arith.constant 0 : i32
    return %c0_i32, %c0_i32_0 : i32, i32
  }
  func.func @transform_5(%arg0: i32, %arg1: i32) -> (i32, i32) {
    %c0_i32 = arith.constant 0 : i32
    %c0_i32_0 = arith.constant 0 : i32
    return %arg0, %c0_i32 : i32, i32
  }
}

</mosaic_0001>

<llo_original>
// kernel: mabsa_head_forward.1
$region0: #{mabsa_head_forward.1}
  #allocation0 [shape = 'u32[]', space=smem, size = 0x4, offset = 0x4, fixed_abs, tag = 'smem constant byte address 0x4 - core index']
  #allocation1 [shape = 'u32[72,128]{1,0:T(1,128)}', space=vmem, size = 0x9000, scoped, tag = 'internal scratch']
  #allocation2 [shape = 'f32[16,128]{1,0:T(8,128)}', space=vmem, size = 0x2000, scoped, tag = 'scratch operand']
  %s0 = inlined_call_operand.hbm [shape: f32[16,32], index: 0, kind: input, shape index: {}]
  %s1 = inlined_call_operand.hbm [shape: bf16[32,128], index: 1, kind: input, shape index: {}]
  %s2 = inlined_call_operand.vmem [shape: f32[1,128], index: 2, kind: input, shape index: {}]
  %s3 = inlined_call_operand.hbm [shape: bf16[128,128], index: 3, kind: input, shape index: {}]
  %s4 = inlined_call_operand.vmem [shape: f32[1,128], index: 4, kind: input, shape index: {}]
  %s5 = inlined_call_operand.vmem [shape: bf16[16,128], index: 5, kind: output, shape index: {}]
  %s6 = sld [smem:[#allocation0]]
  $region50: #{mabsa_head_forward.1} parent=0
    _
  %s8 = ssub.s32 1, %s6
  %s9 = scalar_select 0, %s8, %s6
  $region1: #{mabsa_head_forward.1} parent=0
    #allocation3 [shape = 'u8[8192]{0}', space=vmem, size = 0x2000, scoped, tag = 'input window, operand 0, single buffered']
    #allocation4 [shape = 's32[1]{0}', space=sflag, size = 0x4, scoped, tag = 'scoped memory for mabsa_head_forward.1']
    #allocation5 [shape = 'u8[8192]{0}', space=vmem, size = 0x2000, scoped, tag = 'input window, operand 1, single buffered']
    #allocation6 [shape = 's32[1]{0}', space=sflag, size = 0x4, scoped, tag = 'scoped memory for mabsa_head_forward.1']
    #allocation7 [shape = 'u8[32768]{0}', space=vmem, size = 0x8000, scoped, tag = 'input window, operand 3, single buffered']
    %10 = vsyncpa [#allocation4], 0
    %11 = vsyncpa [#allocation6], 0
    // Predicated region
    $region2: #{mabsa_head_forward.1} parent=1 // pred_check
      _
    $region3: #{mabsa_head_forward.1} parent=1 // pred_check_branch
      %13 = sbr.rel (0) target = $region5
    $region4: #{mabsa_head_forward.1} parent=1 // pred_region
      %15 = vsyncadd [#allocation4], 0
      %s16 = sshll.u32 %s0, 4
      %s17 = int_to_ptr.hbm [resolvable:$true] %s16
      %s18 = sshll.u32 [#allocation3], 4
      %s19 = int_to_ptr.vmem [resolvable:$true] %s18
      %24 = dma.hbm_to_vmem [thread:$0]  %s17, 256, %s19, [#allocation4], 128, 128, 8
    $region5: #{mabsa_head_forward.1} parent=1 // pred_fallthru
      _
    // Predicated region
    $region6: #{mabsa_head_forward.1} parent=1 // pred_check
      _
    $region7: #{mabsa_head_forward.1} parent=1 // pred_check_branch
      %26 = sbr.rel (0) target = $region9
    $region8: #{mabsa_head_forward.1} parent=1 // pred_region
      %28 = vsyncadd [#allocation6], 0
      %s29 = sshll.u32 %s1, 4
      %s30 = int_to_ptr.hbm [resolvable:$true] %s29
      %s31 = sshll.u32 [#allocation5], 4
      %s32 = int_to_ptr.vmem [resolvable:$true] %s31
      %37 = dma.hbm_to_vmem [thread:$0]  %s30, 256, %s32, [#allocation6], 64, 64, 4
    $region9: #{mabsa_head_forward.1} parent=1 // pred_fallthru
      _
    // Predicated region
    $region10: #{mabsa_head_forward.1} parent=1 // pred_check
      _
    $region11: #{mabsa_head_forward.1} parent=1 // pred_check_branch
      %39 = sbr.rel (0) target = $region13
    $region12: #{mabsa_head_forward.1} parent=1 // pred_region
      _
    $region13: #{mabsa_head_forward.1} parent=1 // pred_fallthru
      _
    // Predicated region
    $region14: #{mabsa_head_forward.1} parent=1 // pred_check
      _
    $region15: #{mabsa_head_forward.1} parent=1 // pred_check_branch
      %41 = sbr.rel (0) target = $region17
    $region16: #{mabsa_head_forward.1} parent=1 // pred_region
      %43 = vsyncadd [#allocation6], 0
      %s44 = sshll.u32 %s3, 4
      %s45 = int_to_ptr.hbm [resolvable:$true] %s44
      %s46 = sshll.u32 [#allocation7], 4
      %s47 = int_to_ptr.vmem [resolvable:$true] %s46
      %52 = dma.hbm_to_vmem [thread:$0]  %s45, 1024, %s47, [#allocation6], 64, 64, 4
    $region17: #{mabsa_head_forward.1} parent=1 // pred_fallthru
      _
    // Predicated region
    $region18: #{mabsa_head_forward.1} parent=1 // pred_check
      _
    $region19: #{mabsa_head_forward.1} parent=1 // pred_check_branch
      %54 = sbr.rel (0) target = $region21
    $region20: #{mabsa_head_forward.1} parent=1 // pred_region
      _
    $region21: #{mabsa_head_forward.1} parent=1 // pred_fallthru
      _
    // Predicated region
    $region22: #{mabsa_head_forward.1} parent=1 // pred_check
      _
    $region23: #{mabsa_head_forward.1} parent=1 // pred_check_branch
      %56 = sbr.rel (0) target = $region25
    $region24: #{mabsa_head_forward.1} parent=1 // pred_region
      %58 = dma.done [#allocation4], 256
    $region25: #{mabsa_head_forward.1} parent=1 // pred_fallthru
      _
    // Predicated region
    $region26: #{mabsa_head_forward.1} parent=1 // pred_check
      _
    $region27: #{mabsa_head_forward.1} parent=1 // pred_check_branch
      %60 = sbr.rel (0) target = $region29
    $region28: #{mabsa_head_forward.1} parent=1 // pred_region
      %62 = dma.done [#allocation6], 256
    $region29: #{mabsa_head_forward.1} parent=1 // pred_fallthru
      _
    // Predicated region
    $region30: #{mabsa_head_forward.1} parent=1 // pred_check
      _
    $region31: #{mabsa_head_forward.1} parent=1 // pred_check_branch
      %64 = sbr.rel (0) target = $region33
    $region32: #{mabsa_head_forward.1} parent=1 // pred_region
      %66 = dma.done [#allocation6], 1024
    $region33: #{mabsa_head_forward.1} parent=1 // pred_fallthru
      _
    %p68 = scmp.eq.s32.totalorder 0, 0
    // Predicated region
    $region34: #{mabsa_head_forward.1} parent=1 // pred_check
      %p69 = pneg %p68
    $region35: #{mabsa_head_forward.1} parent=1 // pred_check_branch
      %71 = sbr.rel (%p69) target = $region37
    $region36: #{mabsa_head_forward.1} parent=1 // pred_region
      %72 = vst [vmem:[#allocation2] sm:$0xff] 0.0
      %73 = vst [vmem:[#allocation2 + $0x8] sm:$0xff] 0.0
    $region37: #{mabsa_head_forward.1} parent=1 // pred_fallthru
      _
    %v74 = vld [vmem:[#allocation3] sm:$0xff]
    %v75 = vld [vmem:[#allocation3 + $0x8] sm:$0xff]
    %v76 = vpack.c.bf16 %v75, %v74
    %v77 = vld [vmem:[#allocation2] sm:$0xff]
    %v78 = vld [vmem:[#allocation2 + $0x8] sm:$0xff]
    %v79 = vld [vmem:[#allocation5] sm:$0xf]
    %v80 = vld [vmem:[#allocation5 + $0x4] sm:$0xf]
    %v81 = vld [vmem:[#allocation5 + $0x8] sm:$0xf]
    %v82 = vld [vmem:[#allocation5 + $0xc] sm:$0xf]
    %v87 = vunpack.c.l.b16 %v79
    %v88 = vunpack.c.l.b16 %v80
    %v89 = vunpack.c.l.b16 %v81
    %v90 = vunpack.c.l.b16 %v82
    %v91 = vpack.c.b16 %v88, %v87
    %v92 = vpack.c.b16 %v90, %v89
    %vm95 = vcmask 261120
    %v97 = vsel %vm95, %v76, 0
    %99 = vmatpush.bf16.msra.mxu0 0
    %100 = vmatpush.bf16.msra.mxu0 0
    %101 = vmatpush.bf16.msra.mxu0 0
    %102 = vmatpush.bf16.msra.mxu0 0
    %103 = vmatpush.bf16.msra.mxu0 0
    %104 = vmatpush.bf16.msra.mxu0 0
    %105 = vmatpush.bf16.msra.mxu0 %v92
    %106 = vmatpush.bf16.msra.mxu0 %v91
    %107 = vmatmul.bf16.gmra.mxu0 %v97
    %v108 = vpop.f32.mrf.mxu0
    %v109 = vadd.f32 0.0, %v108
    %v110 = vpop.f32.mrf.mxu0
    %v111 = vadd.f32 0.0, %v110
    %112 = vdwg.mxu0
    %v113 = vadd.f32 %v77, %v109
    %v114 = vadd.f32 %v78, %v111
    %115 = vst [vmem:[#allocation2] sm:$0xff] %v113
    %116 = vst [vmem:[#allocation2 + $0x8] sm:$0xff] %v114
    // Predicated region
    $region38: #{mabsa_head_forward.1} parent=1 // pred_check
      %p117 = pneg %p68
    $region39: #{mabsa_head_forward.1} parent=1 // pred_check_branch
      %119 = sbr.rel (%p117) target = $region41
    $region40: #{mabsa_head_forward.1} parent=1 // pred_region
      %v120 = vld [vmem:[#allocation2] sm:$0xff]
      %v121 = vld [vmem:[#allocation2 + $0x8] sm:$0xff]
      %v122 = vld [vmem:[%s2] sm:$0x1]
      %v124 = vperm.slane %v122, 0
      %v126 = vadd.f32 %v120, %v124
      %v127 = vadd.f32 %v121, %v124
      %v128 = vmax.f32 %v126, 0.0
      %v129 = vmax.f32 %v127, 0.0
      %v130 = vpack.c.bf16 %v129, %v128
      %v131 = vld [vmem:[#allocation7] sm:$0xf]
      %v132 = vld [vmem:[#allocation7 + $0x4] sm:$0xf]
      %v133 = vld [vmem:[#allocation7 + $0x8] sm:$0xf]
      %v134 = vld [vmem:[#allocation7 + $0xc] sm:$0xf]
      %v135 = vld [vmem:[#allocation7 + $0x10] sm:$0xf]
      %v136 = vld [vmem:[#allocation7 + $0x14] sm:$0xf]
      %v137 = vld [vmem:[#allocation7 + $0x18] sm:$0xf]
      %v138 = vld [vmem:[#allocation7 + $0x1c] sm:$0xf]
      %v139 = vld [vmem:[#allocation7 + $0x20] sm:$0xf]
      %v140 = vld [vmem:[#allocation7 + $0x24] sm:$0xf]
      %v141 = vld [vmem:[#allocation7 + $0x28] sm:$0xf]
      %v142 = vld [vmem:[#allocation7 + $0x2c] sm:$0xf]
      %v143 = vld [vmem:[#allocation7 + $0x30] sm:$0xf]
      %v144 = vld [vmem:[#allocation7 + $0x34] sm:$0xf]
      %v145 = vld [vmem:[#allocation7 + $0x38] sm:$0xf]
      %v146 = vld [vmem:[#allocation7 + $0x3c] sm:$0xf]
      %v147 = vld [vmem:[%s4] sm:$0x1]
      %v149 = vperm.slane %v147, 0
      %v167 = vunpack.c.l.b16 %v131
      %v168 = vunpack.c.l.b16 %v132
      %v169 = vunpack.c.l.b16 %v133
      %v170 = vunpack.c.l.b16 %v134
      %v171 = vunpack.c.l.b16 %v135
      %v172 = vunpack.c.l.b16 %v136
      %v173 = vunpack.c.l.b16 %v137
      %v174 = vunpack.c.l.b16 %v138
      %v175 = vunpack.c.l.b16 %v139
      %v176 = vunpack.c.l.b16 %v140
      %v177 = vunpack.c.l.b16 %v141
      %v178 = vunpack.c.l.b16 %v142
      %v179 = vunpack.c.l.b16 %v143
      %v180 = vunpack.c.l.b16 %v144
      %v181 = vunpack.c.l.b16 %v145
      %v182 = vunpack.c.l.b16 %v146
      %v183 = vpack.c.b16 %v168, %v167
      %v184 = vpack.c.b16 %v170, %v169
      %v185 = vpack.c.b16 %v172, %v171
      %v186 = vpack.c.b16 %v174, %v173
      %v187 = vpack.c.b16 %v176, %v175
      %v188 = vpack.c.b16 %v178, %v177
      %v189 = vpack.c.b16 %v180, %v179
      %v190 = vpack.c.b16 %v182, %v181
      %199 = vmatpush.bf16.msra.mxu0 %v190
      %200 = vmatpush.bf16.msra.mxu0 %v189
      %201 = vmatpush.bf16.msra.mxu0 %v188
      %202 = vmatpush.bf16.msra.mxu0 %v187
      %203 = vmatpush.bf16.msra.mxu0 %v186
      %204 = vmatpush.bf16.msra.mxu0 %v185
      %205 = vmatpush.bf16.msra.mxu0 %v184
      %206 = vmatpush.bf16.msra.mxu0 %v183
      %207 = vmatmul.bf16.gmra.mxu0 %v130
      %v208 = vpop.f32.mrf.mxu0
      %v209 = vadd.f32 %v149, %v208
      %v210 = vpop.f32.mrf.mxu0
      %v211 = vadd.f32 %v149, %v210
      %212 = vdwg.mxu0
      %v213 = vpack.c.bf16 %v209, %v209
      %v214 = vpack.c.bf16 %v211, %v211
      %215 = vst [vmem:[%s5] sm:$0xf] %v213
      %216 = vst [vmem:[%s5 + $0x4] sm:$0xf] %v214
    $region41: #{mabsa_head_forward.1} parent=1 // pred_fallthru
      _
    // Predicated region
    $region42: #{mabsa_head_forward.1} parent=1 // pred_check
      _
    $region43: #{mabsa_head_forward.1} parent=1 // pred_check_branch
      %218 = sbr.rel (0) target = $region45
    $region44: #{mabsa_head_forward.1} parent=1 // pred_region
      _
    $region45: #{mabsa_head_forward.1} parent=1 // pred_fallthru
      _
    // Predicated region
    $region46: #{mabsa_head_forward.1} parent=1 // pred_check
      _
    $region47: #{mabsa_head_forward.1} parent=1 // pred_check_branch
      %220 = sbr.rel (0) target = $region49
    $region48: #{mabsa_head_forward.1} parent=1 // pred_region
      _
    $region49: #{mabsa_head_forward.1} parent=1 // pred_fallthru
      _
    %221 = vsyncpa [#allocation4], 1
    %222 = vsyncpa [#allocation6], 1

</llo_original>
